<compile_context>
chip_gen: v7x
topology: tpu7x:2x2x1
jax: 0.10.0
libtpu: 0.0.40
codegen_flags: <defaults>
</compile_context>

<pallas_src>
import jax
import jax.numpy as jnp
from jax import lax
from jax.experimental import pallas as pl
from jax.experimental.pallas import tpu as pltpu


# ------------------------------ tile selection -------------------------------

def _pick_tile_h(h, w, target_elems=1024):
    """Divisor th of h with (th*w) % 128 == 0 (lane-dense output blocks); fallback th=h."""
    cands = [th for th in range(1, h + 1) if h % th == 0 and (th * w) % 128 == 0]
    if not cands:
        return h
    for th in cands:
        if th * w >= target_elems:
            return th
    return cands[-1]


def _pick_tile_sp(hw, target_elems=2048):
    """Lane-dense (multiple of 128) divisor of H*W for the BN-apply pass; fallback hw."""
    cands = [t for t in range(128, hw + 1, 128) if hw % t == 0]
    if not cands:
        return hw
    best = cands[0]
    for t in cands:
        if t <= target_elems:
            best = t
    return best


# ----------------------------- Pallas kernels --------------------------------

def _make_conv_bnstats_kernel(width, msp, cout):
    """Fused 3x3 conv (as 3 shifted matmuls) + per-tile BN partial statistics.

    a_ref : (1, 1, 3*Cin, (tile_h+2)*W)  width-tap-gathered, halo'd input tile
    w_ref : (3, Cout, 3*Cin)             per-height-tap weight matrices
    y_ref : (1, Cout, tile_h*W)          conv output tile (lane-dense stores)
    s_ref : (1, 1, Cout, 1)              per-tile per-channel sum
    q_ref : (1, 1, Cout, 1)              per-tile per-channel sum of squares
    """
    def kernel(a_ref, w_ref, y_ref, s_ref, q_ref):
        a = a_ref[0, 0]                                   # (3*Cin, (tile_h+2)*W)
        # height tap ki -> contiguous lane window [ki*W, ki*W + tile_h*W)
        acc = jnp.dot(w_ref[0], a[:, 0:msp],
                      preferred_element_type=jnp.float32)
        for ki in range(1, 3):                            # unrolled, static slices
            acc = acc + jnp.dot(w_ref[ki],
                                a[:, ki * width: ki * width + msp],
                                preferred_element_type=jnp.float32)
        y_ref[0] = acc                                    # (Cout, tile_h*W), unmasked vst
        s_ref[0, 0] = jnp.sum(acc, axis=1, keepdims=True)         # (Cout, 1)
        q_ref[0, 0] = jnp.sum(acc * acc, axis=1, keepdims=True)   # (Cout, 1)
    return kernel


def _bn_relu_kernel(y_ref, sc_ref, sh_ref, o_ref):
    # y_ref/o_ref: (1, Cout, tile_sp); sc_ref/sh_ref: (Cout, 1)
    y = y_ref[0]
    o_ref[0] = jnp.maximum(y * sc_ref[...] + sh_ref[...], 0.0)


# ------------------------------ Python wrapper --------------------------------

def basic_conv2d_forward(x, conv_w, conv_b, bn_gamma, bn_beta,
                         *, eps=1e-3, tile_h=None, mxu_dtype=None):
    """x: (N, Cin, H, W) f32; returns (N, Cout, H, W) f32.

    mxu_dtype: optionally jnp.bfloat16 to halve matmul-input HBM bytes on v6e/v7x
    (f32 accumulation is kept).  Default None = f32 to match reference numerics.
    """
    del conv_b  # exactly cancelled by the batch-mean subtraction of train-mode BN
    n, cin, h, w = x.shape
    cout = conv_w.shape[0]
    k = 3
    hw = h * w

    if tile_h is None:
        tile_h = _pick_tile_h(h, w)
    if h % tile_h != 0 or (tile_h != h and (tile_h * w) % 128 != 0):
        tile_h = h                       # always-legal fallback: one tile per sample
    n_ht = h // tile_h
    msp = tile_h * w                     # flattened spatial elems per conv tile
    halo_w = (tile_h + 2) * w            # tile rows incl. the 1-row halo on each side

    # ---- wrapper-side prep (cheap; ~3x input bytes, no 9x im2col slab) ----
    xp = jnp.pad(x, ((0, 0), (0, 0), (1, 1), (1, 1)))            # (N,Cin,H+2,W+2)
    # gather the 3 width taps into the channel axis -> (N, 3*Cin, H+2, W)
    a0 = jnp.concatenate([xp[:, :, :, kj:kj + w] for kj in range(k)], axis=1)
    # height tiles with halo, flattened spatially -> (N, n_ht, 3*Cin, (tile_h+2)*W)
    a_tiles = jnp.stack(
        [a0[:, :, t * tile_h: t * tile_h + tile_h + 2, :] for t in range(n_ht)],
        axis=1).reshape(n, n_ht, k * cin, halo_w)
    # weights (Cout,Cin,3,3) -> (ki, Cout, kj*Cin+c) matching the channel concat order
    w3 = jnp.transpose(conv_w, (2, 0, 3, 1)).reshape(k, cout, k * cin)

    if mxu_dtype is not None:
        a_tiles = a_tiles.astype(mxu_dtype)
        w3 = w3.astype(mxu_dtype)

    # ---- pass 1: fused conv + BN partial statistics (fully parallel grid) ----
    conv_kernel = _make_conv_bnstats_kernel(w, msp, cout)
    y, psum, psq = pl.pallas_call(
        conv_kernel,
        out_shape=(
            jax.ShapeDtypeStruct((n, cout, hw), jnp.float32),       # conv slab, NC(HW)
            jax.ShapeDtypeStruct((n, n_ht, cout, 1), jnp.float32),  # partial sums
            jax.ShapeDtypeStruct((n, n_ht, cout, 1), jnp.float32),  # partial sum-sq
        ),
        grid_spec=pltpu.PrefetchScalarGridSpec(
            num_scalar_prefetch=0,
            grid=(n, n_ht),
            in_specs=[
                pl.BlockSpec((1, 1, k * cin, halo_w), lambda i, t: (i, t, 0, 0)),
                pl.BlockSpec((k, cout, k * cin), lambda i, t: (0, 0, 0)),
            ],
            out_specs=(
                pl.BlockSpec((1, cout, msp), lambda i, t: (i, 0, t)),
                pl.BlockSpec((1, 1, cout, 1), lambda i, t: (i, t, 0, 0)),
                pl.BlockSpec((1, 1, cout, 1), lambda i, t: (i, t, 0, 0)),
            ),
        ),
        compiler_params=pltpu.CompilerParams(
            dimension_semantics=("parallel", "parallel")),
    )(a_tiles, w3)

    # ---- tiny (Cout,)-sized stats finalize (negligible XLA work) ----
    m_total = float(n * hw)
    tot = jnp.sum(psum, axis=(0, 1, 3))
    tot2 = jnp.sum(psq, axis=(0, 1, 3))
    mean = tot / m_total
    var = jnp.maximum(tot2 / m_total - mean * mean, 0.0)   # biased batch variance
    scale = bn_gamma * lax.rsqrt(var + eps)
    shift = bn_beta - mean * scale

    # ---- pass 2: scale/shift + ReLU, tiled over spatial, lane-dense stores ----
    tile_sp = _pick_tile_sp(hw)
    out = pl.pallas_call(
        _bn_relu_kernel,
        out_shape=jax.ShapeDtypeStruct((n, cout, hw), jnp.float32),
        grid_spec=pltpu.PrefetchScalarGridSpec(
            num_scalar_prefetch=0,
            grid=(n, hw // tile_sp),
            in_specs=[
                pl.BlockSpec((1, cout, tile_sp), lambda i, t: (i, 0, t)),
                pl.BlockSpec((cout, 1), lambda i, t: (0, 0)),
                pl.BlockSpec((cout, 1), lambda i, t: (0, 0)),
            ],
            out_specs=pl.BlockSpec((1, cout, tile_sp), lambda i, t: (i, 0, t)),
        ),
        compiler_params=pltpu.CompilerParams(
            dimension_semantics=("parallel", "parallel")),
    )(y, scale.reshape(cout, 1), shift.reshape(cout, 1))

    # (N, Cout, H*W) is already NCHW memory order -> metadata-only reshape, no transpose.
    return out.reshape(n, cout, h, w)


# -------------------------------- reference -----------------------------------

def _reference(x, conv_w, conv_b, bn_gamma, bn_beta):
    y = lax.conv_general_dilated(
        x, conv_w, window_strides=(1, 1), padding=((1, 1), (1, 1)),
        dimension_numbers=("NCHW", "OIHW", "NCHW"))
    y = y + conv_b.reshape(1, -1, 1, 1)
    mean = jnp.mean(y, axis=(0, 2, 3), keepdims=True)
    var = jnp.mean((y - mean) ** 2, axis=(0, 2, 3), keepdims=True)
    yhat = (y - mean) * lax.rsqrt(var + 1e-3)
    yhat = yhat * bn_gamma.reshape(1, -1, 1, 1) + bn_beta.reshape(1, -1, 1, 1)
    return jnp.maximum(yhat, 0.0)


# ---------------------------------- main ---------------------------------------

if __name__ == "__main__":
    N, C_IN, H, W = 2, 4, 16, 16
    C_OUT, K = 8, 3

    key = jax.random.PRNGKey(0)
    kx, kw, kb, kg, kbt = jax.random.split(key, 5)

    x = jax.random.normal(kx, (N, C_IN, H, W), dtype=jnp.float32)
    conv_w = 0.1 * jax.random.normal(kw, (C_OUT, C_IN, K, K), dtype=jnp.float32)
    conv_b = 0.1 * jax.random.normal(kb, (C_OUT,), dtype=jnp.float32)
    bn_gamma = 1.0 + 0.1 * jax.random.normal(kg, (C_OUT,), dtype=jnp.float32)
    bn_beta = 0.1 * jax.random.normal(kbt, (C_OUT,), dtype=jnp.float32)

    # tile_h=8 exercises the spatial-tiling path (grid (N=2, n_ht=2), lane-dense
    # (Cout, 128) output blocks); omit it to let the wrapper auto-pick.
    out = basic_conv2d_forward(x, conv_w, conv_b, bn_gamma, bn_beta, tile_h=8)
    out = jax.block_until_ready(out)

    ref = _reference(x, conv_w, conv_b, bn_gamma, bn_beta)
    assert out.shape == (N, C_OUT, H, W)
    assert jnp.allclose(out, ref, atol=1e-4, rtol=1e-4), \
        f"max abs err = {float(jnp.max(jnp.abs(out - ref)))}"

    print("KERNEL_OK")
</pallas_src>

<mosaic_0001>
module attributes {stable_mosaic.version = 11 : i64} {
  func.func @kernel(%arg0: i32, %arg1: i32, %arg2: memref<1x1x12x160xf32, #tpu.memory_space<vmem>>, %arg3: memref<3x8x12xf32, #tpu.memory_space<vmem>>, %arg4: memref<1x8x128xf32, #tpu.memory_space<vmem>>, %arg5: memref<1x1x8x1xf32, #tpu.memory_space<vmem>>, %arg6: memref<1x1x8x1xf32, #tpu.memory_space<vmem>>) attributes {dimension_semantics = [#tpu.dimension_semantics<parallel>, #tpu.dimension_semantics<parallel>], iteration_bounds = array<i64: 2, 2>, scalar_prefetch = 0 : i64, scratch_operands = 0 : i64, tpu.core_type = #tpu.core_type<tc>, window_params = [{transform_indices = @transform_0, window_bounds = array<i64: 1, 1, 12, 160>}, {pipeline_mode = #tpu.pipeline_mode<synchronous>, transform_indices = @transform_1, window_bounds = array<i64: 3, 8, 12>}, {transform_indices = @transform_2, window_bounds = array<i64: 1, 8, 128>}, {transform_indices = @transform_3, window_bounds = array<i64: 1, 1, 8, 1>}, {transform_indices = @transform_4, window_bounds = array<i64: 1, 1, 8, 1>}]} {
    %c0 = arith.constant 0 : index
    %c0_0 = arith.constant 0 : index
    %c0_1 = arith.constant 0 : index
    %c0_2 = arith.constant 0 : index
    %0 = vector.load %arg2[%c0, %c0_0, %c0_1, %c0_2] : memref<1x1x12x160xf32, #tpu.memory_space<vmem>>, vector<1x1x12x160xf32>
    %1 = vector.shape_cast %0 : vector<1x1x12x160xf32> to vector<12x160xf32>
    %c0_3 = arith.constant 0 : index
    %c0_4 = arith.constant 0 : index
    %c0_5 = arith.constant 0 : index
    %2 = vector.load %arg3[%c0_3, %c0_4, %c0_5] : memref<3x8x12xf32, #tpu.memory_space<vmem>>, vector<1x8x12xf32>
    %3 = vector.shape_cast %2 : vector<1x8x12xf32> to vector<8x12xf32>
    %4 = vector.extract_strided_slice %1 {offsets = [0, 0], sizes = [12, 128], strides = [1, 1]} : vector<12x160xf32> to vector<12x128xf32>
    %cst = arith.constant dense<0.000000e+00> : vector<8x128xf32>
    %5 = tpu.matmul %3, %4, %cst {dimension_numbers = #tpu.dot_dimension_numbers<[1], [0], [0], [1], [0, 0, 1, 1], [], []>} : vector<8x12xf32>, vector<12x128xf32>, vector<8x128xf32> -> vector<8x128xf32>
    %c1 = arith.constant 1 : index
    %c0_6 = arith.constant 0 : index
    %c0_7 = arith.constant 0 : index
    %6 = vector.load %arg3[%c1, %c0_6, %c0_7] : memref<3x8x12xf32, #tpu.memory_space<vmem>>, vector<1x8x12xf32>
    %7 = vector.shape_cast %6 : vector<1x8x12xf32> to vector<8x12xf32>
    %8 = vector.extract_strided_slice %1 {offsets = [0, 16], sizes = [12, 128], strides = [1, 1]} : vector<12x160xf32> to vector<12x128xf32>
    %cst_8 = arith.constant dense<0.000000e+00> : vector<8x128xf32>
    %9 = tpu.matmul %7, %8, %cst_8 {dimension_numbers = #tpu.dot_dimension_numbers<[1], [0], [0], [1], [0, 0, 1, 1], [], []>} : vector<8x12xf32>, vector<12x128xf32>, vector<8x128xf32> -> vector<8x128xf32>
    %10 = arith.addf %5, %9 : vector<8x128xf32>
    %c2 = arith.constant 2 : index
    %c0_9 = arith.constant 0 : index
    %c0_10 = arith.constant 0 : index
    %11 = vector.load %arg3[%c2, %c0_9, %c0_10] : memref<3x8x12xf32, #tpu.memory_space<vmem>>, vector<1x8x12xf32>
    %12 = vector.shape_cast %11 : vector<1x8x12xf32> to vector<8x12xf32>
    %13 = vector.extract_strided_slice %1 {offsets = [0, 32], sizes = [12, 128], strides = [1, 1]} : vector<12x160xf32> to vector<12x128xf32>
    %cst_11 = arith.constant dense<0.000000e+00> : vector<8x128xf32>
    %14 = tpu.matmul %12, %13, %cst_11 {dimension_numbers = #tpu.dot_dimension_numbers<[1], [0], [0], [1], [0, 0, 1, 1], [], []>} : vector<8x12xf32>, vector<12x128xf32>, vector<8x128xf32> -> vector<8x128xf32>
    %15 = arith.addf %10, %14 : vector<8x128xf32>
    %c0_12 = arith.constant 0 : index
    %c0_13 = arith.constant 0 : index
    %c0_14 = arith.constant 0 : index
    %16 = vector.load %arg4[%c0_12, %c0_13, %c0_14] : memref<1x8x128xf32, #tpu.memory_space<vmem>>, vector<1x8x128xf32>
    %17 = vector.shape_cast %16 : vector<1x8x128xf32> to vector<8x128xf32>
    %18 = vector.shape_cast %15 : vector<8x128xf32> to vector<1x8x128xf32>
    tpu.vector_store %arg4[%c0_12, %c0_13, %c0_14], %18 {strides = array<i32>} : memref<1x8x128xf32, #tpu.memory_space<vmem>>, vector<1x8x128xf32>,
    %cst_15 = arith.constant dense<0.000000e+00> : vector<8xf32>
    %19 = vector.multi_reduction <add>, %15, %cst_15 [1] : vector<8x128xf32> to vector<8xf32>
    %20 = vector.shape_cast %19 : vector<8xf32> to vector<8x1xf32>
    %c0_16 = arith.constant 0 : index
    %c0_17 = arith.constant 0 : index
    %c0_18 = arith.constant 0 : index
    %c0_19 = arith.constant 0 : index
    %21 = vector.load %arg5[%c0_16, %c0_17, %c0_18, %c0_19] : memref<1x1x8x1xf32, #tpu.memory_space<vmem>>, vector<1x1x8x1xf32>
    %22 = vector.shape_cast %21 : vector<1x1x8x1xf32> to vector<8x1xf32>
    %23 = vector.shape_cast %20 : vector<8x1xf32> to vector<1x1x8x1xf32>
    tpu.vector_store %arg5[%c0_16, %c0_17, %c0_18, %c0_19], %23 {strides = array<i32>} : memref<1x1x8x1xf32, #tpu.memory_space<vmem>>, vector<1x1x8x1xf32>,
    %24 = arith.mulf %15, %15 : vector<8x128xf32>
    %cst_20 = arith.constant dense<0.000000e+00> : vector<8xf32>
    %25 = vector.multi_reduction <add>, %24, %cst_20 [1] : vector<8x128xf32> to vector<8xf32>
    %26 = vector.shape_cast %25 : vector<8xf32> to vector<8x1xf32>
    %c0_21 = arith.constant 0 : index
    %c0_22 = arith.constant 0 : index
    %c0_23 = arith.constant 0 : index
    %c0_24 = arith.constant 0 : index
    %27 = vector.load %arg6[%c0_21, %c0_22, %c0_23, %c0_24] : memref<1x1x8x1xf32, #tpu.memory_space<vmem>>, vector<1x1x8x1xf32>
    %28 = vector.shape_cast %27 : vector<1x1x8x1xf32> to vector<8x1xf32>
    %29 = vector.shape_cast %26 : vector<8x1xf32> to vector<1x1x8x1xf32>
    tpu.vector_store %arg6[%c0_21, %c0_22, %c0_23, %c0_24], %29 {strides = array<i32>} : memref<1x1x8x1xf32, #tpu.memory_space<vmem>>, vector<1x1x8x1xf32>,
    return
  }
  func.func @transform_0(%arg0: i32, %arg1: i32) -> (i32, i32, i32, i32) {
    %c0_i32 = arith.constant 0 : i32
    %c0_i32_0 = arith.constant 0 : i32
    %c0_i32_1 = arith.constant 0 : i32
    return %arg0, %arg1, %c0_i32, %c0_i32_0 : i32, i32, i32, i32
  }
  func.func @transform_1(%arg0: i32, %arg1: i32) -> (i32, i32, i32) {
    %c0_i32 = arith.constant 0 : i32
    %c0_i32_0 = arith.constant 0 : i32
    %c0_i32_1 = arith.constant 0 : i32
    %c0_i32_2 = arith.constant 0 : i32
    return %c0_i32, %c0_i32_0, %c0_i32_1 : i32, i32, i32
  }
  func.func @transform_2(%arg0: i32, %arg1: i32) -> (i32, i32, i32) {
    %c0_i32 = arith.constant 0 : i32
    %c0_i32_0 = arith.constant 0 : i32
    return %arg0, %c0_i32, %arg1 : i32, i32, i32
  }
  func.func @transform_3(%arg0: i32, %arg1: i32) -> (i32, i32, i32, i32) {
    %c0_i32 = arith.constant 0 : i32
    %c0_i32_0 = arith.constant 0 : i32
    %c0_i32_1 = arith.constant 0 : i32
    return %arg0, %arg1, %c0_i32, %c0_i32_0 : i32, i32, i32, i32
  }
  func.func @transform_4(%arg0: i32, %arg1: i32) -> (i32, i32, i32, i32) {
    %c0_i32 = arith.constant 0 : i32
    %c0_i32_0 = arith.constant 0 : i32
    %c0_i32_1 = arith.constant 0 : i32
    return %arg0, %arg1, %c0_i32, %c0_i32_0 : i32, i32, i32, i32
  }
}

</mosaic_0001>

<llo_original>
// kernel: tpu_custom_call.1
$region0: #{tpu_custom_call.1}
  #allocation0 [shape = 'u32[]', space=smem, size = 0x4, offset = 0x4, fixed_abs, tag = 'smem constant byte address 0x4 - core index']
  #allocation1 [shape = 'u32[144,128]{1,0:T(1,128)}', space=vmem, size = 0x12000, scoped, tag = 'internal scratch']
  %s0 = inlined_call_operand.vmem [shape: f32[2,2,12,160], index: 0, kind: input, shape index: {}]
  %s1 = inlined_call_operand.vmem [shape: f32[3,8,12], index: 1, kind: input, shape index: {}]
  %s2 = inlined_call_operand.hbm [shape: f32[2,8,256], index: 2, kind: output, shape index: {0}]
  %s3 = inlined_call_operand.vmem [shape: f32[2,2,8,1], index: 3, kind: output, shape index: {1}]
  %s4 = inlined_call_operand.vmem [shape: f32[2,2,8,1], index: 4, kind: output, shape index: {2}]
  %5 = xla_tuple %s2, %s3, %s4
  %s6 = sld [smem:[#allocation0]]
  $region57: #{tpu_custom_call.1} parent=0
    _
  %s8 = ssub.s32 1, %s6
  %s9 = scalar_select 0, %s8, %s6
  $region1: #{tpu_custom_call.1} parent=0
    #allocation2 [shape = 'u8[8192]{0}', space=vmem, size = 0x2000, scoped, tag = 'output window, operand 0']
    #allocation3 [shape = 's32[2]{0}', space=sflag, size = 0x8, scoped, tag = 'scoped memory for tpu_custom_call.1']
    %10 = vsyncpa [#allocation3], 0
    %s11 = scalar_lea.sflag [#allocation3], 1
    %12 = vsyncpa %s11, 0
    loop: start=0, step=1, limit=6
    $region2: #{tpu_custom_call.1} parent=1 // loop_pre_header
      _
    $region3: #{tpu_custom_call.1} parent=1 // loop_header
      %s14 = sphi 0, %s18
      %p15 = scmp.ge.s32.totalorder %s14, 6
      %s21 = sphi 0, %s33
      %s22 = sphi 0, %s29
      %s23 = sphi 0, %s21
      %s24 = sphi 0, %s22
      %s25 = sphi 0, %s23
      %s26 = sphi 0, %s24
      %s38 = sphi 0, %s40
      %s41 = sphi 0, %s38
      %s42 = sphi 0, %s41
      %s58 = sphi 0, %s42
      %s62 = sphi 0, %s62
      %s64 = sphi 0, %s62
      %s65 = sphi 0, %s64
      %s79 = sphi 0, %s65
      %s87 = sphi 0, %s89
      %s90 = sphi 0, %s87
      %s91 = sphi 0, %s90
      %s107 = sphi 0, %s91
      %s115 = sphi 0, %s117
      %s118 = sphi 0, %s115
      %s119 = sphi 0, %s118
      %s135 = sphi 0, %s119
      %s143 = sphi 0, %s145
      %s146 = sphi 0, %s143
      %s147 = sphi 0, %s146
      %s163 = sphi 0, %s147
    $region4: #{tpu_custom_call.1} parent=1 // loop_header_branch
      %17 = sbr.rel (%p15) target = $region8
    $region5: #{tpu_custom_call.1} parent=1 // loop_body
      %s19 = ssub.s32 %s14, 1
      %s20 = ssub.s32 %s14, 2
      %s27 = sadd.s32 1, %s22
      %p28 = scmp.ge.s32.totalorder %s27, 2
      %s29 = scalar_select %p28, 0, %s27
      %s30 = sadd.s32 1, %s21
      %s31 = scalar_select %p28, %s30, %s21
      %p32 = scmp.ge.s32.totalorder %s31, 2
      %s33 = scalar_select %p32, 0, %s31
      %s34 = ssub.s32 %s21, %s33
      %s35 = ssub.s32 %s22, %s29
      %s36 = sor.u32 %s34, %s35
      %p37 = scmp.eq.s32.totalorder %s36, 0
      %s39 = sadd.s32 %s38, 1
      %s40 = scalar_select %p37, %s38, %s39
      %p43 = pneg %p37
      %p44 = scmp.eq.s32.totalorder %s14, 3
      %p45 = por %p43, %p44
      %p46 = scmp.ne.s32.totalorder %s38, %s41
      %p47 = scmp.eq.s32.totalorder %s14, 0
      %p48 = por %p46, %p47
      %p49 = scmp.ne.s32.totalorder %s38, %s41
      %p50 = scmp.eq.s32.totalorder %s19, 3
      %p51 = por %p49, %p50
      %p52 = scmp.ne.s32.totalorder %s41, %s42
      %p53 = scmp.eq.s32.totalorder %s19, 0
      %p54 = por %p52, %p53
      %p55 = scmp.ne.s32.totalorder %s41, %s42
      %p56 = scmp.eq.s32.totalorder %s20, 3
      %p57 = por %p55, %p56
      %p59 = scmp.ne.s32.totalorder %s42, %s58
      %p60 = scmp.eq.s32.totalorder %s20, 0
      %p61 = por %p59, %p60
      %s63 = sadd.s32 %s62, 1
      %p66 = scmp.eq.s32.totalorder %s14, 3
      %p67 = scmp.ne.s32.totalorder %s62, %s64
      %p68 = scmp.eq.s32.totalorder %s14, 0
      %p69 = por %p67, %p68
      %p70 = scmp.ne.s32.totalorder %s62, %s64
      %p71 = scmp.eq.s32.totalorder %s19, 3
      %p72 = por %p70, %p71
      %p73 = scmp.ne.s32.totalorder %s64, %s65
      %p74 = scmp.eq.s32.totalorder %s19, 0
      %p75 = por %p73, %p74
      %p76 = scmp.ne.s32.totalorder %s64, %s65
      %p77 = scmp.eq.s32.totalorder %s20, 3
      %p78 = por %p76, %p77
      %p80 = scmp.ne.s32.totalorder %s65, %s79
      %p81 = scmp.eq.s32.totalorder %s20, 0
      %p82 = por %p80, %p81
      %s83 = ssub.s32 %s21, %s33
      %s84 = ssub.s32 %s22, %s29
      %s85 = sor.u32 %s83, %s84
      %p86 = scmp.eq.s32.totalorder %s85, 0
      %s88 = sadd.s32 %s87, 1
      %s89 = scalar_select %p86, %s87, %s88
      %p92 = pneg %p86
      %p93 = scmp.eq.s32.totalorder %s14, 3
      %p94 = por %p92, %p93
      %p95 = scmp.ne.s32.totalorder %s87, %s90
      %p96 = scmp.eq.s32.totalorder %s14, 0
      %p97 = por %p95, %p96
      %p98 = scmp.ne.s32.totalorder %s87, %s90
      %p99 = scmp.eq.s32.totalorder %s19, 3
      %p100 = por %p98, %p99
      %p101 = scmp.ne.s32.totalorder %s90, %s91
      %p102 = scmp.eq.s32.totalorder %s19, 0
      %p103 = por %p101, %p102
      %p104 = scmp.ne.s32.totalorder %s90, %s91
      %p105 = scmp.eq.s32.totalorder %s20, 3
      %p106 = por %p104, %p105
      %p108 = scmp.ne.s32.totalorder %s91, %s107
      %p109 = scmp.eq.s32.totalorder %s20, 0
      %p110 = por %p108, %p109
      %s111 = ssub.s32 %s21, %s33
      %s112 = ssub.s32 %s22, %s29
      %s113 = sor.u32 %s111, %s112
      %p114 = scmp.eq.s32.totalorder %s113, 0
      %s116 = sadd.s32 %s115, 1
      %s117 = scalar_select %p114, %s115, %s116
      %p120 = pneg %p114
      %p121 = scmp.eq.s32.totalorder %s14, 3
      %p122 = por %p120, %p121
      %p123 = scmp.ne.s32.totalorder %s115, %s118
      %p124 = scmp.eq.s32.totalorder %s14, 0
      %p125 = por %p123, %p124
      %p126 = scmp.ne.s32.totalorder %s115, %s118
      %p127 = scmp.eq.s32.totalorder %s19, 3
      %p128 = por %p126, %p127
      %p129 = scmp.ne.s32.totalorder %s118, %s119
      %p130 = scmp.eq.s32.totalorder %s19, 0
      %p131 = por %p129, %p130
      %p132 = scmp.ne.s32.totalorder %s118, %s119
      %p133 = scmp.eq.s32.totalorder %s20, 3
      %p134 = por %p132, %p133
      %p136 = scmp.ne.s32.totalorder %s119, %s135
      %p137 = scmp.eq.s32.totalorder %s20, 0
      %p138 = por %p136, %p137
      %s139 = ssub.s32 %s21, %s33
      %s140 = ssub.s32 %s22, %s29
      %s141 = sor.u32 %s139, %s140
      %p142 = scmp.eq.s32.totalorder %s141, 0
      %s144 = sadd.s32 %s143, 1
      %s145 = scalar_select %p142, %s143, %s144
      %p148 = pneg %p142
      %p149 = scmp.eq.s32.totalorder %s14, 3
      %p150 = por %p148, %p149
      %p151 = scmp.ne.s32.totalorder %s143, %s146
      %p152 = scmp.eq.s32.totalorder %s14, 0
      %p153 = por %p151, %p152
      %p154 = scmp.ne.s32.totalorder %s143, %s146
      %p155 = scmp.eq.s32.totalorder %s19, 3
      %p156 = por %p154, %p155
      %p157 = scmp.ne.s32.totalorder %s146, %s147
      %p158 = scmp.eq.s32.totalorder %s19, 0
      %p159 = por %p157, %p158
      %p160 = scmp.ne.s32.totalorder %s146, %s147
      %p161 = scmp.eq.s32.totalorder %s20, 3
      %p162 = por %p160, %p161
      %p164 = scmp.ne.s32.totalorder %s147, %s163
      %p165 = scmp.eq.s32.totalorder %s20, 0
      %p166 = por %p164, %p165
      %p167 = scmp.le.s32.totalorder 1, %s14
      %p168 = scmp.lt.s32.totalorder %s14, 5
      %p169 = pnand %p167, %p168
      %p170 = pneg %p169
      // Predicated region
      $region9: #{tpu_custom_call.1} parent=5 // pred_check
        _
      $region10: #{tpu_custom_call.1} parent=5 // pred_check_branch
        %172 = sbr.rel (%p169) target = $region12
      $region11: #{tpu_custom_call.1} parent=5 // pred_region
        %s173 = ssub.s32 %s14, 1
        // Predicated region
        $region13: #{tpu_custom_call.1} parent=11 // pred_check
          %p174 = pneg %p75
        $region14: #{tpu_custom_call.1} parent=11 // pred_check_branch
          %176 = sbr.rel (%p174) target = $region16
        $region15: #{tpu_custom_call.1} parent=11 // pred_region
          _
        $region16: #{tpu_custom_call.1} parent=11 // pred_fallthru
          _
      $region12: #{tpu_custom_call.1} parent=5 // pred_fallthru
        _
      %p177 = scmp.lt.s32.totalorder %s14, 4
      // Predicated region
      $region17: #{tpu_custom_call.1} parent=5 // pred_check
        %p178 = pneg %p177
      $region18: #{tpu_custom_call.1} parent=5 // pred_check_branch
        %180 = sbr.rel (%p178) target = $region20
      $region19: #{tpu_custom_call.1} parent=5 // pred_region
        // Predicated region
        $region21: #{tpu_custom_call.1} parent=19 // pred_check
          %p181 = pneg %p48
        $region22: #{tpu_custom_call.1} parent=19 // pred_check_branch
          %183 = sbr.rel (%p181) target = $region24
        $region23: #{tpu_custom_call.1} parent=19 // pred_region
          %p184 = scmp.lt.s32.totalorder %s21, 1
          %s185 = scalar_select %p184, %s21, 1
          %p186 = scmp.lt.s32.totalorder %s22, 1
          %s187 = scalar_select %p186, %s22, 1
          %s188 = smul.addr %s187, 4
          %s189 = smul.addr %s185, 8
          %s190 = sadd.s32 %s188, %s189
          %s191 = smul.addr %s190, 8
          %s192 = scalar_lea.vmem %s0, %s191
        $region24: #{tpu_custom_call.1} parent=19 // pred_fallthru
          _
      $region20: #{tpu_custom_call.1} parent=5 // pred_fallthru
        _
      %p193 = scmp.le.s32.totalorder 1, %s14
      %p194 = scmp.lt.s32.totalorder %s14, 5
      %p195 = pnand %p193, %p194
      %p196 = pneg %p195
      // Predicated region
      $region25: #{tpu_custom_call.1} parent=5 // pred_check
        _
      $region26: #{tpu_custom_call.1} parent=5 // pred_check_branch
        %198 = sbr.rel (%p195) target = $region28
      $region27: #{tpu_custom_call.1} parent=5 // pred_region
        %s199 = ssub.s32 %s14, 1
        %p200 = scmp.lt.s32.totalorder %s23, 1
        %s201 = scalar_select %p200, %s23, 1
        %p202 = scmp.lt.s32.totalorder %s24, 1
        %s203 = scalar_select %p202, %s24, 1
        %s204 = smul.addr %s203, 4
        %s205 = smul.addr %s201, 8
        %s206 = sadd.s32 %s204, %s205
        %s207 = smul.addr %s206, 8
        %s208 = scalar_lea.vmem %s0, %s207
        %p209 = pneg %p54
        %p210 = pneg %p51
        %p211 = pneg %p75
        %p212 = pneg %p72
        %p213 = pneg %p103
        %p214 = pneg %p100
        %s215 = sand.u32 %s90, 1
        %s216 = scalar_lea.sflag [#allocation3], %s215
        %s217 = sand.u32 %s90, 1
        %s218 = smul.addr %s217, 8
        %s219 = scalar_lea.vmem [#allocation2], %s218
        %p220 = pneg %p131
        %p221 = pneg %p128
        %p222 = scmp.lt.s32.totalorder %s23, 1
        %s223 = scalar_select %p222, %s23, 1
        %p224 = scmp.lt.s32.totalorder %s24, 1
        %s225 = scalar_select %p224, %s24, 1
        %s226 = smul.addr %s223, 2
        %s227 = sadd.s32 %s225, %s226
        %s228 = smul.addr %s227, 8
        %s229 = scalar_lea.vmem %s3, %s228
        %p230 = pneg %p159
        %p231 = pneg %p156
        %p232 = scmp.lt.s32.totalorder %s23, 1
        %s233 = scalar_select %p232, %s23, 1
        %p234 = scmp.lt.s32.totalorder %s24, 1
        %s235 = scalar_select %p234, %s24, 1
        %s236 = smul.addr %s233, 2
        %s237 = sadd.s32 %s235, %s236
        %s238 = smul.addr %s237, 8
        %s239 = scalar_lea.vmem %s4, %s238
        %p240 = scmp.lt.s32.totalorder %s23, 1
        %s241 = scalar_select %p240, %s23, 1
        %p242 = scmp.lt.s32.totalorder %s24, 1
        %s243 = scalar_select %p242, %s24, 1
        %s244 = smul.addr %s243, 4
        %s245 = smul.addr %s241, 8
        %s246 = sadd.s32 %s244, %s245
        %s247 = smul.addr %s246, 8
        %s248 = scalar_lea.vmem %s0, %s247
        %p249 = scmp.lt.s32.totalorder %s23, 1
        %s250 = scalar_select %p249, %s23, 1
        %p251 = scmp.lt.s32.totalorder %s24, 1
        %s252 = scalar_select %p251, %s24, 1
        %s253 = smul.addr %s250, 2
        %s254 = sadd.s32 %s252, %s253
        %s255 = smul.addr %s254, 8
        %s256 = scalar_lea.vmem %s3, %s255
        %p257 = scmp.lt.s32.totalorder %s23, 1
        %s258 = scalar_select %p257, %s23, 1
        %p259 = scmp.lt.s32.totalorder %s24, 1
        %s260 = scalar_select %p259, %s24, 1
        %s261 = smul.addr %s258, 2
        %s262 = sadd.s32 %s260, %s261
        %s263 = smul.addr %s262, 8
        %s264 = scalar_lea.vmem %s4, %s263
        %v265 = vld [vmem:[%s248] sm:$0xff]
        %v266 = vld [vmem:[%s248 + $0x8] sm:$0xff]
        %v267 = vld [vmem:[%s248 + $0x10] sm:$0xf]
        %v268 = vld [vmem:[%s248 + $0x18] sm:$0xf]
        %v269 = vld [vmem:[%s1] sm:$0xff]
        %s270 = scalar_lea.vmem %s1, 8
        %v271 = vld [vmem:[%s270] sm:$0xff]
        %276 = vrot.lane.b32.xlu0 %v265, 112
        %v277 = vpop.permute.xlu0 %276
        %278 = vrot.lane.b32.xlu0 %v266, 112
        %v279 = vpop.permute.xlu0 %278
        %280 = vrot.lane.b32.xlu0 %v267, 112
        %v281 = vpop.permute.xlu0 %280
        %282 = vrot.lane.b32.xlu0 %v268, 112
        %v283 = vpop.permute.xlu0 %282
        %vm284 = vcmask 916480
        %v285 = vsel %vm284, %v277, %v279
        %v286 = vsel %vm284, %v281, %v283
        %vm288 = vcmask 97280
        %v290 = vsel %vm288, %v271, 0
        %vm292 = vcmask 1043456
        %v293 = vsel %vm292, %v286, 0
        %295 = vmatprep.subr.mxu0 0.0
        %296 = vmatpush1.msra.mxu0 %v285
        %297 = vmatprep.subr.mxu0 0.0
        %298 = vmatpush1.msra.mxu0 %v293
        %299 = vmatprep.subr.mxu0 0.0
        %300 = vmatpush1.msra.mxu0 0.0
        %301 = vmatprep.subr.mxu0 0.0
        %302 = vmatpush1.msra.mxu0 0.0
        %303 = vmatprep.subr.mxu0 0.0
        %304 = vmatpush1.msra.mxu0 0.0
        %305 = vmatprep.subr.mxu0 0.0
        %306 = vmatpush1.msra.mxu0 0.0
        %307 = vmatprep.subr.mxu0 0.0
        %308 = vmatpush1.msra.mxu0 0.0
        %309 = vmatprep.subr.mxu0 0.0
        %310 = vmatpush1.msra.mxu0 0.0
        %311 = vmatprep.subr.mxu0 0.0
        %312 = vmatpush1.msra.mxu0 0.0
        %313 = vmatprep.subr.mxu0 0.0
        %314 = vmatpush1.msra.mxu0 0.0
        %315 = vmatprep.subr.mxu0 0.0
        %316 = vmatpush1.msra.mxu0 0.0
        %317 = vmatprep.subr.mxu0 0.0
        %318 = vmatpush1.msra.mxu0 0.0
        %319 = vmatprep.subr.mxu0 0.0
        %320 = vmatpush1.msra.mxu0 0.0
        %321 = vmatprep.subr.mxu0 0.0
        %322 = vmatpush1.msra.mxu0 0.0
        %323 = vmatprep.subr.mxu0 0.0
        %324 = vmatpush1.msra.mxu0 0.0
        %325 = vmatprep.subr.mxu0 0.0
        %326 = vmatpush1.msra.mxu0 0.0
        %327 = vmatprep.subr.mxu0 0.0
        %328 = vmatpush1.msra.mxu0 0.0
        %329 = vmatprep.subr.mxu0 0.0
        %330 = vmatpush1.msra.mxu0 0.0
        %331 = vmatprep.subr.mxu0 0.0
        %332 = vmatpush1.msra.mxu0 0.0
        %333 = vmatprep.subr.mxu0 0.0
        %334 = vmatpush1.msra.mxu0 0.0
        %335 = vmatprep.subr.mxu0 0.0
        %336 = vmatpush1.msra.mxu0 0.0
        %337 = vmatprep.subr.mxu0 0.0
        %338 = vmatpush1.msra.mxu0 0.0
        %339 = vmatprep.subr.mxu0 0.0
        %340 = vmatpush1.msra.mxu0 0.0
        %341 = vmatprep.subr.mxu0 0.0
        %342 = vmatpush1.msra.mxu0 0.0
        %343 = vmatprep.subr.mxu0 0.0
        %344 = vmatpush1.msra.mxu0 0.0
        %345 = vmatprep.subr.mxu0 0.0
        %346 = vmatpush1.msra.mxu0 0.0
        %347 = vmatprep.subr.mxu0 0.0
        %348 = vmatpush1.msra.mxu0 0.0
        %349 = vmatprep.subr.mxu0 0.0
        %350 = vmatpush1.msra.mxu0 0.0
        %351 = vmatprep.subr.mxu0 0.0
        %352 = vmatpush1.msra.mxu0 0.0
        %353 = vmatprep.subr.mxu0 0.0
        %354 = vmatpush1.msra.mxu0 0.0
        %355 = vmatprep.subr.mxu0 0.0
        %356 = vmatpush1.msra.mxu0 0.0
        %357 = vmatprep.subr.mxu0 0.0
        %358 = vmatpush1.msra.mxu0 0.0
        %359 = vmatprep.mubr.f32.mxu0 0.0
        %360 = vmatmul.mubr.f32.gmra.mrb[0].mxu0 %v290
        %v361 = vpop.f32.mrb[0].mxu0
        %v362 = vadd.f32 0.0, %v361
        %v363 = vpop.f32.mrb[0].mxu0
        %364 = vdwg.mxu0
        %v366 = vsel %vm288, %v269, 0
        %v368 = vsel %vm292, %v267, 0
        %370 = vmatprep.subr.mxu0 0.0
        %371 = vmatpush1.msra.mxu0 %v265
        %372 = vmatprep.subr.mxu0 0.0
        %373 = vmatpush1.msra.mxu0 %v368
        %374 = vmatprep.subr.mxu0 0.0
        %375 = vmatpush1.msra.mxu0 0.0
        %376 = vmatprep.subr.mxu0 0.0
        %377 = vmatpush1.msra.mxu0 0.0
        %378 = vmatprep.subr.mxu0 0.0
        %379 = vmatpush1.msra.mxu0 0.0
        %380 = vmatprep.subr.mxu0 0.0
        %381 = vmatpush1.msra.mxu0 0.0
        %382 = vmatprep.subr.mxu0 0.0
        %383 = vmatpush1.msra.mxu0 0.0
        %384 = vmatprep.subr.mxu0 0.0
        %385 = vmatpush1.msra.mxu0 0.0
        %386 = vmatprep.subr.mxu0 0.0
        %387 = vmatpush1.msra.mxu0 0.0
        %388 = vmatprep.subr.mxu0 0.0
        %389 = vmatpush1.msra.mxu0 0.0
        %390 = vmatprep.subr.mxu0 0.0
        %391 = vmatpush1.msra.mxu0 0.0
        %392 = vmatprep.subr.mxu0 0.0
        %393 = vmatpush1.msra.mxu0 0.0
        %394 = vmatprep.subr.mxu0 0.0
        %395 = vmatpush1.msra.mxu0 0.0
        %396 = vmatprep.subr.mxu0 0.0
        %397 = vmatpush1.msra.mxu0 0.0
        %398 = vmatprep.subr.mxu0 0.0
        %399 = vmatpush1.msra.mxu0 0.0
        %400 = vmatprep.subr.mxu0 0.0
        %401 = vmatpush1.msra.mxu0 0.0
        %402 = vmatprep.subr.mxu0 0.0
        %403 = vmatpush1.msra.mxu0 0.0
        %404 = vmatprep.subr.mxu0 0.0
        %405 = vmatpush1.msra.mxu0 0.0
        %406 = vmatprep.subr.mxu0 0.0
        %407 = vmatpush1.msra.mxu0 0.0
        %408 = vmatprep.subr.mxu0 0.0
        %409 = vmatpush1.msra.mxu0 0.0
        %410 = vmatprep.subr.mxu0 0.0
        %411 = vmatpush1.msra.mxu0 0.0
        %412 = vmatprep.subr.mxu0 0.0
        %413 = vmatpush1.msra.mxu0 0.0
        %414 = vmatprep.subr.mxu0 0.0
        %415 = vmatpush1.msra.mxu0 0.0
        %416 = vmatprep.subr.mxu0 0.0
        %417 = vmatpush1.msra.mxu0 0.0
        %418 = vmatprep.subr.mxu0 0.0
        %419 = vmatpush1.msra.mxu0 0.0
        %420 = vmatprep.subr.mxu0 0.0
        %421 = vmatpush1.msra.mxu0 0.0
        %422 = vmatprep.subr.mxu0 0.0
        %423 = vmatpush1.msra.mxu0 0.0
        %424 = vmatprep.subr.mxu0 0.0
        %425 = vmatpush1.msra.mxu0 0.0
        %426 = vmatprep.subr.mxu0 0.0
        %427 = vmatpush1.msra.mxu0 0.0
        %428 = vmatprep.subr.mxu0 0.0
        %429 = vmatpush1.msra.mxu0 0.0
        %430 = vmatprep.subr.mxu0 0.0
        %431 = vmatpush1.msra.mxu0 0.0
        %432 = vmatprep.subr.mxu0 0.0
        %433 = vmatpush1.msra.mxu0 0.0
        %434 = vmatprep.mubr.f32.mxu0 0.0
        %435 = vmatmul.mubr.f32.gmra.mrb[0].mxu0 %v366
        %v436 = vpop.f32.mrb[0].mxu0
        %v437 = vadd.f32 %v362, %v436
        %v438 = vpop.f32.mrb[0].mxu0
        %439 = vdwg.mxu0
        %s440 = scalar_lea.vmem %s1, 16
        %v441 = vld [vmem:[%s440] sm:$0xff]
        %442 = vrot.lane.b32.xlu0 %v265, 96
        %v443 = vpop.permute.xlu0 %442
        %444 = vrot.lane.b32.xlu0 %v266, 96
        %v445 = vpop.permute.xlu0 %444
        %446 = vrot.lane.b32.xlu0 %v267, 96
        %v447 = vpop.permute.xlu0 %446
        %448 = vrot.lane.b32.xlu0 %v268, 96
        %v449 = vpop.permute.xlu0 %448
        %vm450 = vcmask 785408
        %v451 = vsel %vm450, %v443, %v445
        %v452 = vsel %vm450, %v447, %v449
        %v455 = vsel %vm288, %v441, 0
        %v457 = vsel %vm292, %v452, 0
        %459 = vmatprep.subr.mxu0 0.0
        %460 = vmatpush1.msra.mxu0 %v451
        %461 = vmatprep.subr.mxu0 0.0
        %462 = vmatpush1.msra.mxu0 %v457
        %463 = vmatprep.subr.mxu0 0.0
        %464 = vmatpush1.msra.mxu0 0.0
        %465 = vmatprep.subr.mxu0 0.0
        %466 = vmatpush1.msra.mxu0 0.0
        %467 = vmatprep.subr.mxu0 0.0
        %468 = vmatpush1.msra.mxu0 0.0
        %469 = vmatprep.subr.mxu0 0.0
        %470 = vmatpush1.msra.mxu0 0.0
        %471 = vmatprep.subr.mxu0 0.0
        %472 = vmatpush1.msra.mxu0 0.0
        %473 = vmatprep.subr.mxu0 0.0
        %474 = vmatpush1.msra.mxu0 0.0
        %475 = vmatprep.subr.mxu0 0.0
        %476 = vmatpush1.msra.mxu0 0.0
        %477 = vmatprep.subr.mxu0 0.0
        %478 = vmatpush1.msra.mxu0 0.0
        %479 = vmatprep.subr.mxu0 0.0
        %480 = vmatpush1.msra.mxu0 0.0
        %481 = vmatprep.subr.mxu0 0.0
        %482 = vmatpush1.msra.mxu0 0.0
        %483 = vmatprep.subr.mxu0 0.0
        %484 = vmatpush1.msra.mxu0 0.0
        %485 = vmatprep.subr.mxu0 0.0
        %486 = vmatpush1.msra.mxu0 0.0
        %487 = vmatprep.subr.mxu0 0.0
        %488 = vmatpush1.msra.mxu0 0.0
        %489 = vmatprep.subr.mxu0 0.0
        %490 = vmatpush1.msra.mxu0 0.0
        %491 = vmatprep.subr.mxu0 0.0
        %492 = vmatpush1.msra.mxu0 0.0
        %493 = vmatprep.subr.mxu0 0.0
        %494 = vmatpush1.msra.mxu0 0.0
        %495 = vmatprep.subr.mxu0 0.0
        %496 = vmatpush1.msra.mxu0 0.0
        %497 = vmatprep.subr.mxu0 0.0
        %498 = vmatpush1.msra.mxu0 0.0
        %499 = vmatprep.subr.mxu0 0.0
        %500 = vmatpush1.msra.mxu0 0.0
        %501 = vmatprep.subr.mxu0 0.0
        %502 = vmatpush1.msra.mxu0 0.0
        %503 = vmatprep.subr.mxu0 0.0
        %504 = vmatpush1.msra.mxu0 0.0
        %505 = vmatprep.subr.mxu0 0.0
        %506 = vmatpush1.msra.mxu0 0.0
        %507 = vmatprep.subr.mxu0 0.0
        %508 = vmatpush1.msra.mxu0 0.0
        %509 = vmatprep.subr.mxu0 0.0
        %510 = vmatpush1.msra.mxu0 0.0
        %511 = vmatprep.subr.mxu0 0.0
        %512 = vmatpush1.msra.mxu0 0.0
        %513 = vmatprep.subr.mxu0 0.0
        %514 = vmatpush1.msra.mxu0 0.0
        %515 = vmatprep.subr.mxu0 0.0
        %516 = vmatpush1.msra.mxu0 0.0
        %517 = vmatprep.subr.mxu0 0.0
        %518 = vmatpush1.msra.mxu0 0.0
        %519 = vmatprep.subr.mxu0 0.0
        %520 = vmatpush1.msra.mxu0 0.0
        %521 = vmatprep.subr.mxu0 0.0
        %522 = vmatpush1.msra.mxu0 0.0
        %523 = vmatprep.mubr.f32.mxu0 0.0
        %524 = vmatmul.mubr.f32.gmra.mrb[0].mxu0 %v455
        %v525 = vpop.f32.mrb[0].mxu0
        %v526 = vadd.f32 0.0, %v525
        %v527 = vpop.f32.mrb[0].mxu0
        %528 = vdwg.mxu0
        %v529 = vadd.f32 %v437, %v526
        %530 = vst [vmem:[%s219] sm:$0xff] %v529
        %531 = vadd.xlane.f32.xlu0 %v529
        %v532 = vpop.xlane.xlu0 %531
        %vm533 = vcmask 7168
        %534 = vst.msk [vmem:[%s256] sm:$0xff] %vm533, %v532
        %v535 = vmul.f32 %v529, %v529
        %536 = vadd.xlane.f32.xlu0 %v535
        %v537 = vpop.xlane.xlu0 %536
        %538 = vst.msk [vmem:[%s264] sm:$0xff] %vm533, %v537
        %s539 = sand.u32 %s90, 1
        %s540 = scalar_lea.sflag [#allocation3], %s539
        %s541 = sand.u32 %s90, 1
        %s542 = smul.addr %s541, 8
        %s543 = scalar_lea.vmem [#allocation2], %s542
        %p544 = scmp.lt.s32.totalorder %s23, 1
        %s545 = scalar_select %p544, %s23, 1
        %p546 = scmp.lt.s32.totalorder %s24, 1
        %s547 = scalar_select %p546, %s24, 1
        %s548 = smul.addr %s545, 2
        %s549 = sadd.s32 %s547, %s548
        %s550 = smul.addr %s549, 8
        %s551 = scalar_lea.vmem %s3, %s550
        %p552 = scmp.lt.s32.totalorder %s23, 1
        %s553 = scalar_select %p552, %s23, 1
        %p554 = scmp.lt.s32.totalorder %s24, 1
        %s555 = scalar_select %p554, %s24, 1
        %s556 = smul.addr %s553, 2
        %s557 = sadd.s32 %s555, %s556
        %s558 = smul.addr %s557, 8
        %s559 = scalar_lea.vmem %s4, %s558
        // Predicated region
        $region29: #{tpu_custom_call.1} parent=27 // pred_check
          %p560 = pneg %p100
        $region30: #{tpu_custom_call.1} parent=27 // pred_check_branch
          %562 = sbr.rel (%p560) target = $region32
        $region31: #{tpu_custom_call.1} parent=27 // pred_region
          %s564 = ssub.s32 128, 128
          %565 = vsyncadd %s540, %s564
          %s566 = smul.addr %s23, 2
          %s567 = sadd.s32 %s24, %s566
          %s568 = smul.addr %s567, 128
          %s569 = scalar_lea.hbm %s2, %s568
          %s571 = sshll.u32 %s543, 4
          %s572 = int_to_ptr.vmem [resolvable:$true] %s571
          %574 = dma.vmem_to_hbm [thread:$0]  %s572, 128, %s569, %s540
        $region32: #{tpu_custom_call.1} parent=27 // pred_fallthru
          _
        // Predicated region
        $region33: #{tpu_custom_call.1} parent=27 // pred_check
          %p575 = pneg %p128
        $region34: #{tpu_custom_call.1} parent=27 // pred_check_branch
          %577 = sbr.rel (%p575) target = $region36
        $region35: #{tpu_custom_call.1} parent=27 // pred_region
          _
        $region36: #{tpu_custom_call.1} parent=27 // pred_fallthru
          _
        // Predicated region
        $region37: #{tpu_custom_call.1} parent=27 // pred_check
          %p578 = pneg %p156
        $region38: #{tpu_custom_call.1} parent=27 // pred_check_branch
          %580 = sbr.rel (%p578) target = $region40
        $region39: #{tpu_custom_call.1} parent=27 // pred_region
          _
        $region40: #{tpu_custom_call.1} parent=27 // pred_fallthru
          _
      $region28: #{tpu_custom_call.1} parent=5 // pred_fallthru
        _
      %p581 = scmp.le.s32.totalorder 2, %s14
      // Predicated region
      $region41: #{tpu_custom_call.1} parent=5 // pred_check
        %p582 = pneg %p581
      $region42: #{tpu_custom_call.1} parent=5 // pred_check_branch
        %584 = sbr.rel (%p582) target = $region44
      $region43: #{tpu_custom_call.1} parent=5 // pred_region
        %s585 = ssub.s32 %s14, 2
        // Predicated region
        $region45: #{tpu_custom_call.1} parent=43 // pred_check
          %p586 = pneg %p106
        $region46: #{tpu_custom_call.1} parent=43 // pred_check_branch
          %588 = sbr.rel (%p586) target = $region48
        $region47: #{tpu_custom_call.1} parent=43 // pred_region
          %s589 = sand.u32 %s91, 1
          %s590 = scalar_lea.sflag [#allocation3], %s589
          %s591 = sand.u32 %s91, 1
          %s592 = smul.addr %s591, 8
          %s593 = scalar_lea.vmem [#allocation2], %s592
          %594 = dma.done %s590, 128
        $region48: #{tpu_custom_call.1} parent=43 // pred_fallthru
          _
        // Predicated region
        $region49: #{tpu_custom_call.1} parent=43 // pred_check
          %p595 = pneg %p134
        $region50: #{tpu_custom_call.1} parent=43 // pred_check_branch
          %597 = sbr.rel (%p595) target = $region52
        $region51: #{tpu_custom_call.1} parent=43 // pred_region
          %p598 = scmp.lt.s32.totalorder %s25, 1
          %s599 = scalar_select %p598, %s25, 1
          %p600 = scmp.lt.s32.totalorder %s26, 1
          %s601 = scalar_select %p600, %s26, 1
          %s602 = smul.addr %s599, 2
          %s603 = sadd.s32 %s601, %s602
          %s604 = smul.addr %s603, 8
          %s605 = scalar_lea.vmem %s3, %s604
        $region52: #{tpu_custom_call.1} parent=43 // pred_fallthru
          _
        // Predicated region
        $region53: #{tpu_custom_call.1} parent=43 // pred_check
          %p606 = pneg %p162
        $region54: #{tpu_custom_call.1} parent=43 // pred_check_branch
          %608 = sbr.rel (%p606) target = $region56
        $region55: #{tpu_custom_call.1} parent=43 // pred_region
          %p609 = scmp.lt.s32.totalorder %s25, 1
          %s610 = scalar_select %p609, %s25, 1
          %p611 = scmp.lt.s32.totalorder %s26, 1
          %s612 = scalar_select %p611, %s26, 1
          %s613 = smul.addr %s610, 2
          %s614 = sadd.s32 %s612, %s613
          %s615 = smul.addr %s614, 8
          %s616 = scalar_lea.vmem %s4, %s615
        $region56: #{tpu_custom_call.1} parent=43 // pred_fallthru
          _
      $region44: #{tpu_custom_call.1} parent=5 // pred_fallthru
        _
    $region6: #{tpu_custom_call.1} parent=1 // loop_footer
      %s18 = sadd.s32 1, %s14
    $region7: #{tpu_custom_call.1} parent=1 // loop_footer_branch
      %13 = sbr.rel target = $region3
    $region8: #{tpu_custom_call.1} parent=1 // loop_exit
      _
    %617 = vsyncpa [#allocation3], 1
    %s618 = scalar_lea.sflag [#allocation3], 1
    %619 = vsyncpa %s618, 1

</llo_original>
